<compile_context>
chip_gen: v6e
topology: v6e:2x2x1
jax: 0.10.0
libtpu: 0.0.40
codegen_flags: <defaults>
</compile_context>

<pallas_src>
import jax
import jax.numpy as jnp
from jax import lax
from jax.experimental import pallas as pl
from jax.experimental.pallas import tpu as pltpu


def _round_up(x, m):
    return ((x + m - 1) // m) * m


def _cdiv(a, b):
    return -(-a // b)


def _pick_vmem_limit():
    """Generation-aware VMEM limit: ~0.75 * capacity, capped at 100 MiB."""
    try:
        info = pltpu.get_tpu_info()
        cap = int(getattr(info, "vmem_capacity_bytes", 0)) or (64 << 20)
    except Exception:
        cap = 64 << 20          # conservative fallback (v7x per-TensorCore VMEM)
    return max(32 << 20, min(cap * 3 // 4, 100 << 20))


def _choose_tiling(S, C_in, hidden, itemsize, vmem_limit):
    """Pick (tile_s, chunk): tile_s = HBM DMA tile (as big as VMEM allows),
    chunk = in-kernel matmul width (bounds the f32 feats temporary)."""
    ru = _round_up
    chunk = min(512, ru(S, 128))                       # multiple of 128
    fixed = (2 * ru(hidden, 8) * ru(C_in, 128) * itemsize   # wc, double-buffered
             + 4 * ru(hidden, 8) * 128 * 4                  # bc + out block, double-buffered
             + ru(hidden, 8) * 128 * 4                      # pooled-sum accumulator
             + 2 * ru(hidden, 8) * chunk * 4)               # f32 feats temp (+slack)
    per_lane = 2 * ru(C_in, 8) * itemsize                   # double-buffered x tile, per lane
    budget = (vmem_limit * 3) // 4 - fixed
    max_tile = max(chunk, (budget // max(per_lane, 1)) // chunk * chunk)
    S_ceil = ru(S, chunk)
    n_s = _cdiv(S_ceil, max_tile)
    tile_s = ru(_cdiv(S_ceil, n_s), chunk)                  # balanced, multiple of chunk
    return tile_s, chunk


def _make_kernel(S, tile_s, chunk, n_chunks, n_s, needs_mask):
    inv_s = 1.0 / float(S)      # Python float -> literal (no captured constant)

    def kernel(x_ref, wc_ref, bc_ref, out_ref, acc_ref):
        # x_ref  : (1, C_in, tile_s)   one image's spatial tile (channels x pixels)
        # wc_ref : (hidden, C_in)      backbone 1x1-conv weight
        # bc_ref : (hidden, 1)  f32    backbone bias
        # out_ref: (1, hidden, 1) f32  pooled (mean) feature column for this image
        # acc_ref: (hidden, 128) f32   pooled partial-sum accumulator (persists over s)
        s = pl.program_id(1)

        @pl.when(s == 0)
        def _init():
            acc_ref[...] = jnp.zeros_like(acc_ref)

        def process_chunk(c):
            start = c * chunk
            if not isinstance(start, int):
                start = pl.multiple_of(start, 128)
            xc = x_ref[0, :, pl.ds(start, chunk)]                  # (C_in, chunk)
            # Backbone 1x1 conv == one 2-D MXU matmul per chunk.
            feats = jnp.dot(wc_ref[...], xc,
                            preferred_element_type=jnp.float32)    # (hidden, chunk) f32
            feats = jnp.maximum(feats + bc_ref[...], 0.0)          # bias + ReLU
            if needs_mask:  # static: only emitted when the spatial extent was padded
                lane = lax.broadcasted_iota(jnp.int32, (1, chunk), 1)
                lane = lane + (s * tile_s + c * chunk)
                feats = jnp.where(lane < S, feats, 0.0)            # select, not mul-by-mask
            # 128-lane VPU adds into the partial-sum accumulator (keeps XLU free).
            for i in range(chunk // 128):
                acc_ref[...] += feats[:, i * 128:(i + 1) * 128]

        if n_chunks == 1:
            process_chunk(0)
        else:
            def body(c, carry):
                process_chunk(c)
                return carry
            lax.fori_loop(0, n_chunks, body, 0, unroll=(n_chunks <= 8))

        @pl.when(s == n_s - 1)
        def _finalize():
            # One cross-lane reduce per image; divide by the TRUE S (unbiased mean).
            pooled = jnp.sum(acc_ref[...], axis=1, keepdims=True) * inv_s  # (hidden, 1)
            out_ref[0] = pooled.astype(out_ref.dtype)

    return kernel


def standard_model_forward(x_nchw, w_conv, b_conv, w_head, b_head,
                           *, tile_s=None, chunk=None):
    """x_nchw: (B, C_in, H, W).  w_conv: (hidden, C_in, 1, 1), b_conv: (hidden,),
    w_head: (num_classes, hidden), b_head: (num_classes,).
    Returns logits (B, num_classes) in float32."""
    B, C_in, H, W = x_nchw.shape
    hidden = w_conv.shape[0]
    S = H * W

    cdt = x_nchw.dtype          # keep producer dtype: bf16 in => bf16 MXU operands
    itemsize = jnp.dtype(cdt).itemsize
    vmem_limit = _pick_vmem_limit()

    auto_tile, auto_chunk = _choose_tiling(S, C_in, hidden, itemsize, vmem_limit)
    if chunk is None:
        chunk = auto_chunk
    if tile_s is None:
        tile_s = auto_tile
    chunk = min(max(128, _round_up(chunk, 128)), _round_up(S, 128))
    tile_s = max(chunk, _round_up(tile_s, chunk))
    S_ceil = _round_up(S, chunk)
    tile_s = min(tile_s, S_ceil)
    n_s = _cdiv(S_ceil, tile_s)
    S_padded = n_s * tile_s
    n_chunks = tile_s // chunk
    needs_mask = (S_padded != S)

    # NCHW -> (B, C_in, S): free contiguous reshape (no HBM transpose round trip).
    x_r = x_nchw.reshape(B, C_in, S)
    if needs_mask:
        x_r = jnp.pad(x_r, ((0, 0), (0, 0), (0, S_padded - S)))   # zero-pad once

    wc = w_conv.reshape(hidden, C_in).astype(cdt)                 # (hidden, C_in)
    bc = b_conv.astype(jnp.float32).reshape(hidden, 1)            # (hidden, 1)

    kernel = _make_kernel(S=S, tile_s=tile_s, chunk=chunk, n_chunks=n_chunks,
                          n_s=n_s, needs_mask=needs_mask)

    grid_spec = pltpu.PrefetchScalarGridSpec(
        num_scalar_prefetch=0,
        grid=(B, n_s),
        in_specs=[
            pl.BlockSpec((1, C_in, tile_s), lambda b, s: (b, 0, s)),  # x tile (streamed)
            pl.BlockSpec((hidden, C_in),    lambda b, s: (0, 0)),     # wc (resident)
            pl.BlockSpec((hidden, 1),       lambda b, s: (0, 0)),     # bc (resident)
        ],
        out_specs=pl.BlockSpec((1, hidden, 1), lambda b, s: (b, 0, 0)),
        scratch_shapes=[pltpu.VMEM((hidden, 128), jnp.float32)],
    )

    flops = 2 * B * S_padded * C_in * hidden
    bytes_accessed = (B * C_in * S_padded * itemsize
                      + hidden * C_in * itemsize + hidden * 4
                      + B * hidden * 4)

    pooled_col = pl.pallas_call(
        kernel,
        out_shape=jax.ShapeDtypeStruct((B, hidden, 1), jnp.float32),
        grid_spec=grid_spec,
        compiler_params=pltpu.CompilerParams(
            dimension_semantics=("parallel", "arbitrary"),
            vmem_limit_bytes=vmem_limit,
        ),
        cost_estimate=pl.CostEstimate(
            flops=flops, transcendentals=0, bytes_accessed=bytes_accessed),
    )(x_r, wc, bc)

    pooled = pooled_col.reshape(B, hidden)                         # free reshape
    # Tiny Linear head as a plain XLA GEMM (keeps head weights out of kernel VMEM).
    return pooled @ w_head.astype(jnp.float32).T + b_head.astype(jnp.float32)[None, :]


def _reference_forward(x_nchw, w_conv, b_conv, w_head, b_head):
    # Pure-JAX reference of the same semantics (for a correctness check).
    B, C_in, H, W = x_nchw.shape
    hidden = w_conv.shape[0]
    x_tok = jnp.transpose(x_nchw, (0, 2, 3, 1)).reshape(B, H * W, C_in)
    feats = jnp.maximum(
        jnp.einsum("bsc,hc->bsh", x_tok, w_conv.reshape(hidden, C_in))
        + b_conv[None, None, :],
        0.0,
    )
    pooled = jnp.mean(feats, axis=1)
    return pooled @ w_head.T + b_head[None, :]


if __name__ == "__main__":
    key = jax.random.PRNGKey(0)
    kx, kwc, kbc, kwh, kbh = jax.random.split(key, 5)

    B, C_in, H, W = 2, 4, 16, 16
    hidden_dim, num_classes = 32, 10

    x = jax.random.normal(kx, (B, C_in, H, W), dtype=jnp.float32)
    w_conv = jax.random.normal(kwc, (hidden_dim, C_in, 1, 1), jnp.float32) * 0.1
    b_conv = jax.random.normal(kbc, (hidden_dim,), jnp.float32) * 0.1
    w_head = jax.random.normal(kwh, (num_classes, hidden_dim), jnp.float32) * 0.1
    b_head = jax.random.normal(kbh, (num_classes,), jnp.float32) * 0.1

    ref = _reference_forward(x, w_conv, b_conv, w_head, b_head)

    # (a) default tiling (single step), (b) forced 2-step spatial reduction
    # (exercises the cross-step accumulator), (c) forced in-kernel chunk loop.
    for kwargs in ({}, {"tile_s": 128, "chunk": 128}, {"tile_s": 256, "chunk": 128}):
        out = standard_model_forward(x, w_conv, b_conv, w_head, b_head, **kwargs)
        out = jax.block_until_ready(out)
        assert out.shape == (B, num_classes)
        assert jnp.allclose(out, ref, atol=2e-2, rtol=2e-2), f"mismatch {kwargs}"

    # Ragged spatial extent (S = 225): exercises wrapper zero-pad + lane mask.
    xr = jax.random.normal(kx, (B, C_in, 15, 15), dtype=jnp.float32)
    outr = jax.block_until_ready(
        standard_model_forward(xr, w_conv, b_conv, w_head, b_head))
    refr = _reference_forward(xr, w_conv, b_conv, w_head, b_head)
    assert outr.shape == (B, num_classes)
    assert jnp.allclose(outr, refr, atol=2e-2, rtol=2e-2), "mismatch ragged"

    print("KERNEL_OK")
</pallas_src>

<mosaic_0001>
module attributes {stable_mosaic.version = 11 : i64} {
  func.func @kernel(%arg0: i32, %arg1: i32, %arg2: memref<1x4x256xf32, #tpu.memory_space<vmem>>, %arg3: memref<32x4xf32, #tpu.memory_space<vmem>>, %arg4: memref<32x1xf32, #tpu.memory_space<vmem>>, %arg5: memref<1x32x1xf32, #tpu.memory_space<vmem>>, %arg6: memref<32x128xf32, #tpu.memory_space<vmem>>) attributes {dimension_semantics = [#tpu.dimension_semantics<parallel>, #tpu.dimension_semantics<arbitrary>], iteration_bounds = array<i64: 2, 1>, scalar_prefetch = 0 : i64, scratch_operands = 1 : i64, tpu.core_type = #tpu.core_type<tc>, window_params = [{transform_indices = @transform_0, window_bounds = array<i64: 1, 4, 256>}, {pipeline_mode = #tpu.pipeline_mode<synchronous>, transform_indices = @transform_1, window_bounds = array<i64: 32, 4>}, {pipeline_mode = #tpu.pipeline_mode<synchronous>, transform_indices = @transform_2, window_bounds = array<i64: 32, 1>}, {transform_indices = @transform_3, window_bounds = array<i64: 1, 32, 1>}]} {
    %c0_i32 = arith.constant 0 : i32
    %0 = arith.cmpi eq, %arg1, %c0_i32 : i32
    %1 = arith.extui %0 : i1 to i32
    %c0_i32_0 = arith.constant 0 : i32
    %2 = arith.cmpi ne, %1, %c0_i32_0 : i32
    scf.if %2 {
      %cst_18 = arith.constant 0.000000e+00 : f32
      %23 = vector.broadcast %cst_18 : f32 to vector<32x128xf32>
      %c0_19 = arith.constant 0 : index
      %c0_20 = arith.constant 0 : index
      %24 = vector.load %arg6[%c0_19, %c0_20] : memref<32x128xf32, #tpu.memory_space<vmem>>, vector<32x128xf32>
      tpu.vector_store %arg6[%c0_19, %c0_20], %23 {strides = array<i32>} : memref<32x128xf32, #tpu.memory_space<vmem>>, vector<32x128xf32>,
    } else {
    }
    %c0 = arith.constant 0 : index
    %c0_1 = arith.constant 0 : index
    %c0_2 = arith.constant 0 : index
    %3 = vector.load %arg2[%c0, %c0_1, %c0_2] : memref<1x4x256xf32, #tpu.memory_space<vmem>>, vector<1x4x256xf32>
    %4 = vector.shape_cast %3 : vector<1x4x256xf32> to vector<4x256xf32>
    %c0_3 = arith.constant 0 : index
    %c0_4 = arith.constant 0 : index
    %5 = vector.load %arg3[%c0_3, %c0_4] : memref<32x4xf32, #tpu.memory_space<vmem>>, vector<32x4xf32>
    %cst = arith.constant dense<0.000000e+00> : vector<32x256xf32>
    %6 = tpu.matmul %5, %4, %cst {dimension_numbers = #tpu.dot_dimension_numbers<[1], [0], [0], [1], [0, 0, 1, 1], [], []>} : vector<32x4xf32>, vector<4x256xf32>, vector<32x256xf32> -> vector<32x256xf32>
    %c0_5 = arith.constant 0 : index
    %c0_6 = arith.constant 0 : index
    %7 = vector.load %arg4[%c0_5, %c0_6] : memref<32x1xf32, #tpu.memory_space<vmem>>, vector<32x1xf32>
    %8 = vector.broadcast %7 : vector<32x1xf32> to vector<32x256xf32>
    %9 = arith.addf %6, %8 : vector<32x256xf32>
    %cst_7 = arith.constant 0.000000e+00 : f32
    %10 = vector.broadcast %cst_7 : f32 to vector<32x256xf32>
    %11 = arith.maximumf %9, %10 : vector<32x256xf32>
    %c0_8 = arith.constant 0 : index
    %c0_9 = arith.constant 0 : index
    %12 = vector.load %arg6[%c0_8, %c0_9] : memref<32x128xf32, #tpu.memory_space<vmem>>, vector<32x128xf32>
    %13 = vector.extract_strided_slice %11 {offsets = [0, 0], sizes = [32, 128], strides = [1, 1]} : vector<32x256xf32> to vector<32x128xf32>
    %14 = arith.addf %12, %13 : vector<32x128xf32>
    %c0_10 = arith.constant 0 : index
    %c0_11 = arith.constant 0 : index
    %15 = vector.load %arg6[%c0_10, %c0_11] : memref<32x128xf32, #tpu.memory_space<vmem>>, vector<32x128xf32>
    tpu.vector_store %arg6[%c0_10, %c0_11], %14 {strides = array<i32>} : memref<32x128xf32, #tpu.memory_space<vmem>>, vector<32x128xf32>,
    %c0_12 = arith.constant 0 : index
    %c0_13 = arith.constant 0 : index
    %16 = vector.load %arg6[%c0_12, %c0_13] : memref<32x128xf32, #tpu.memory_space<vmem>>, vector<32x128xf32>
    %17 = vector.extract_strided_slice %11 {offsets = [0, 128], sizes = [32, 128], strides = [1, 1]} : vector<32x256xf32> to vector<32x128xf32>
    %18 = arith.addf %16, %17 : vector<32x128xf32>
    %c0_14 = arith.constant 0 : index
    %c0_15 = arith.constant 0 : index
    %19 = vector.load %arg6[%c0_14, %c0_15] : memref<32x128xf32, #tpu.memory_space<vmem>>, vector<32x128xf32>
    tpu.vector_store %arg6[%c0_14, %c0_15], %18 {strides = array<i32>} : memref<32x128xf32, #tpu.memory_space<vmem>>, vector<32x128xf32>,
    %c0_i32_16 = arith.constant 0 : i32
    %20 = arith.cmpi eq, %arg1, %c0_i32_16 : i32
    %21 = arith.extui %20 : i1 to i32
    %c0_i32_17 = arith.constant 0 : i32
    %22 = arith.cmpi ne, %21, %c0_i32_17 : i32
    scf.if %22 {
      %c0_18 = arith.constant 0 : index
      %c0_19 = arith.constant 0 : index
      %23 = vector.load %arg6[%c0_18, %c0_19] : memref<32x128xf32, #tpu.memory_space<vmem>>, vector<32x128xf32>
      %cst_20 = arith.constant dense<0.000000e+00> : vector<32xf32>
      %24 = vector.multi_reduction <add>, %23, %cst_20 [1] : vector<32x128xf32> to vector<32xf32>
      %25 = vector.shape_cast %24 : vector<32xf32> to vector<32x1xf32>
      %cst_21 = arith.constant 3.906250e-03 : f32
      %26 = vector.broadcast %cst_21 : f32 to vector<32x1xf32>
      %27 = arith.mulf %25, %26 : vector<32x1xf32>
      %c0_22 = arith.constant 0 : index
      %c0_23 = arith.constant 0 : index
      %c0_24 = arith.constant 0 : index
      %28 = vector.load %arg5[%c0_22, %c0_23, %c0_24] : memref<1x32x1xf32, #tpu.memory_space<vmem>>, vector<1x32x1xf32>
      %29 = vector.shape_cast %28 : vector<1x32x1xf32> to vector<32x1xf32>
      %30 = vector.shape_cast %27 : vector<32x1xf32> to vector<1x32x1xf32>
      tpu.vector_store %arg5[%c0_22, %c0_23, %c0_24], %30 {strides = array<i32>} : memref<1x32x1xf32, #tpu.memory_space<vmem>>, vector<1x32x1xf32>,
    } else {
    }
    return
  }
  func.func @transform_0(%arg0: i32, %arg1: i32) -> (i32, i32, i32) {
    %c0_i32 = arith.constant 0 : i32
    %c0_i32_0 = arith.constant 0 : i32
    return %arg0, %c0_i32, %arg1 : i32, i32, i32
  }
  func.func @transform_1(%arg0: i32, %arg1: i32) -> (i32, i32) {
    %c0_i32 = arith.constant 0 : i32
    %c0_i32_0 = arith.constant 0 : i32
    %c0_i32_1 = arith.constant 0 : i32
    return %c0_i32, %c0_i32_0 : i32, i32
  }
  func.func @transform_2(%arg0: i32, %arg1: i32) -> (i32, i32) {
    %c0_i32 = arith.constant 0 : i32
    %c0_i32_0 = arith.constant 0 : i32
    %c0_i32_1 = arith.constant 0 : i32
    return %c0_i32, %c0_i32_0 : i32, i32
  }
  func.func @transform_3(%arg0: i32, %arg1: i32) -> (i32, i32, i32) {
    %c0_i32 = arith.constant 0 : i32
    %c0_i32_0 = arith.constant 0 : i32
    %c0_i32_1 = arith.constant 0 : i32
    return %arg0, %c0_i32, %c0_i32_0 : i32, i32, i32
  }
}

</mosaic_0001>

<llo_original>
// kernel: tpu_custom_call.1
$region0: #{tpu_custom_call.1}
  #allocation0 [shape = 'u32[]', space=smem, size = 0x4, offset = 0x4, fixed_abs, tag = 'smem constant byte address 0x4 - core index']
  #allocation1 [shape = 'u32[144,128]{1,0:T(1,128)}', space=vmem, size = 0x12000, scoped, tag = 'internal scratch']
  #allocation2 [shape = 'f32[32,128]{1,0:T(8,128)}', space=vmem, size = 0x4000, scoped, tag = 'scratch operand']
  %s0 = inlined_call_operand.vmem [shape: f32[2,4,256], index: 0, kind: input, shape index: {}]
  %s1 = inlined_call_operand.vmem [shape: f32[32,4], index: 1, kind: input, shape index: {}]
  %s2 = inlined_call_operand.vmem [shape: f32[32,1], index: 2, kind: input, shape index: {}]
  %s3 = inlined_call_operand.vmem [shape: f32[2,32,1], index: 3, kind: output, shape index: {}]
  %s4 = sld [smem:[#allocation0]]
  $region53: #{tpu_custom_call.1} parent=0
    _
  %s6 = ssub.s32 1, %s4
  %s7 = scalar_select 0, %s6, %s4
  loop: start=0, step=1, limit=4
  $region2: #{tpu_custom_call.1} parent=0 // loop_pre_header
    _
  $region3: #{tpu_custom_call.1} parent=0 // loop_header
    %s9 = sphi 0, %s13
    %p10 = scmp.ge.s32.totalorder %s9, 4
    %s16 = sphi 0, %s28
    %s17 = sphi 0, %s24
    %s18 = sphi 0, %s16
    %s19 = sphi 0, %s17
    %s20 = sphi 0, %s18
    %s21 = sphi 0, %s19
    %s33 = sphi 0, %s35
    %s36 = sphi 0, %s33
    %s37 = sphi 0, %s36
    %s53 = sphi 0, %s37
    %s57 = sphi 0, %s57
    %s59 = sphi 0, %s57
    %s60 = sphi 0, %s59
    %s74 = sphi 0, %s60
    %s78 = sphi 0, %s78
    %s80 = sphi 0, %s78
    %s81 = sphi 0, %s80
    %s95 = sphi 0, %s81
    %s101 = sphi 0, %s103
    %s104 = sphi 0, %s101
    %s105 = sphi 0, %s104
    %s121 = sphi 0, %s105
  $region4: #{tpu_custom_call.1} parent=0 // loop_header_branch
    %12 = sbr.rel (%p10) target = $region8
  $region5: #{tpu_custom_call.1} parent=0 // loop_body
    %s14 = ssub.s32 %s9, 1
    %s15 = ssub.s32 %s9, 2
    %s22 = sadd.s32 1, %s17
    %p23 = scmp.ge.s32.totalorder %s22, 1
    %s24 = scalar_select %p23, 0, %s22
    %s25 = sadd.s32 1, %s16
    %s26 = scalar_select %p23, %s25, %s16
    %p27 = scmp.ge.s32.totalorder %s26, 2
    %s28 = scalar_select %p27, 0, %s26
    %s29 = ssub.s32 %s16, %s28
    %s30 = ssub.s32 %s17, %s24
    %s31 = sor.u32 %s29, %s30
    %p32 = scmp.eq.s32.totalorder %s31, 0
    %s34 = sadd.s32 %s33, 1
    %s35 = scalar_select %p32, %s33, %s34
    %p38 = pneg %p32
    %p39 = scmp.eq.s32.totalorder %s9, 1
    %p40 = por %p38, %p39
    %p41 = scmp.ne.s32.totalorder %s33, %s36
    %p42 = scmp.eq.s32.totalorder %s9, 0
    %p43 = por %p41, %p42
    %p44 = scmp.ne.s32.totalorder %s33, %s36
    %p45 = scmp.eq.s32.totalorder %s14, 1
    %p46 = por %p44, %p45
    %p47 = scmp.ne.s32.totalorder %s36, %s37
    %p48 = scmp.eq.s32.totalorder %s14, 0
    %p49 = por %p47, %p48
    %p50 = scmp.ne.s32.totalorder %s36, %s37
    %p51 = scmp.eq.s32.totalorder %s15, 1
    %p52 = por %p50, %p51
    %p54 = scmp.ne.s32.totalorder %s37, %s53
    %p55 = scmp.eq.s32.totalorder %s15, 0
    %p56 = por %p54, %p55
    %s58 = sadd.s32 %s57, 1
    %p61 = scmp.eq.s32.totalorder %s9, 1
    %p62 = scmp.ne.s32.totalorder %s57, %s59
    %p63 = scmp.eq.s32.totalorder %s9, 0
    %p64 = por %p62, %p63
    %p65 = scmp.ne.s32.totalorder %s57, %s59
    %p66 = scmp.eq.s32.totalorder %s14, 1
    %p67 = por %p65, %p66
    %p68 = scmp.ne.s32.totalorder %s59, %s60
    %p69 = scmp.eq.s32.totalorder %s14, 0
    %p70 = por %p68, %p69
    %p71 = scmp.ne.s32.totalorder %s59, %s60
    %p72 = scmp.eq.s32.totalorder %s15, 1
    %p73 = por %p71, %p72
    %p75 = scmp.ne.s32.totalorder %s60, %s74
    %p76 = scmp.eq.s32.totalorder %s15, 0
    %p77 = por %p75, %p76
    %s79 = sadd.s32 %s78, 1
    %p82 = scmp.eq.s32.totalorder %s9, 1
    %p83 = scmp.ne.s32.totalorder %s78, %s80
    %p84 = scmp.eq.s32.totalorder %s9, 0
    %p85 = por %p83, %p84
    %p86 = scmp.ne.s32.totalorder %s78, %s80
    %p87 = scmp.eq.s32.totalorder %s14, 1
    %p88 = por %p86, %p87
    %p89 = scmp.ne.s32.totalorder %s80, %s81
    %p90 = scmp.eq.s32.totalorder %s14, 0
    %p91 = por %p89, %p90
    %p92 = scmp.ne.s32.totalorder %s80, %s81
    %p93 = scmp.eq.s32.totalorder %s15, 1
    %p94 = por %p92, %p93
    %p96 = scmp.ne.s32.totalorder %s81, %s95
    %p97 = scmp.eq.s32.totalorder %s15, 0
    %p98 = por %p96, %p97
    %s99 = ssub.s32 %s16, %s28
    %p100 = scmp.eq.s32.totalorder %s99, 0
    %s102 = sadd.s32 %s101, 1
    %s103 = scalar_select %p100, %s101, %s102
    %p106 = pneg %p100
    %p107 = scmp.eq.s32.totalorder %s9, 1
    %p108 = por %p106, %p107
    %p109 = scmp.ne.s32.totalorder %s101, %s104
    %p110 = scmp.eq.s32.totalorder %s9, 0
    %p111 = por %p109, %p110
    %p112 = scmp.ne.s32.totalorder %s101, %s104
    %p113 = scmp.eq.s32.totalorder %s14, 1
    %p114 = por %p112, %p113
    %p115 = scmp.ne.s32.totalorder %s104, %s105
    %p116 = scmp.eq.s32.totalorder %s14, 0
    %p117 = por %p115, %p116
    %p118 = scmp.ne.s32.totalorder %s104, %s105
    %p119 = scmp.eq.s32.totalorder %s15, 1
    %p120 = por %p118, %p119
    %p122 = scmp.ne.s32.totalorder %s105, %s121
    %p123 = scmp.eq.s32.totalorder %s15, 0
    %p124 = por %p122, %p123
    %p125 = scmp.le.s32.totalorder 1, %s9
    %p126 = scmp.lt.s32.totalorder %s9, 3
    %p127 = pnand %p125, %p126
    %p128 = pneg %p127
    // Predicated region
    $region9: #{tpu_custom_call.1} parent=5 // pred_check
      _
    $region10: #{tpu_custom_call.1} parent=5 // pred_check_branch
      %130 = sbr.rel (%p127) target = $region12
    $region11: #{tpu_custom_call.1} parent=5 // pred_region
      %s131 = ssub.s32 %s9, 1
      // Predicated region
      $region13: #{tpu_custom_call.1} parent=11 // pred_check
        %p132 = pneg %p70
      $region14: #{tpu_custom_call.1} parent=11 // pred_check_branch
        %134 = sbr.rel (%p132) target = $region16
      $region15: #{tpu_custom_call.1} parent=11 // pred_region
        _
      $region16: #{tpu_custom_call.1} parent=11 // pred_fallthru
        _
      // Predicated region
      $region17: #{tpu_custom_call.1} parent=11 // pred_check
        %p135 = pneg %p91
      $region18: #{tpu_custom_call.1} parent=11 // pred_check_branch
        %137 = sbr.rel (%p135) target = $region20
      $region19: #{tpu_custom_call.1} parent=11 // pred_region
        _
      $region20: #{tpu_custom_call.1} parent=11 // pred_fallthru
        _
    $region12: #{tpu_custom_call.1} parent=5 // pred_fallthru
      _
    %p138 = scmp.lt.s32.totalorder %s9, 2
    // Predicated region
    $region21: #{tpu_custom_call.1} parent=5 // pred_check
      %p139 = pneg %p138
    $region22: #{tpu_custom_call.1} parent=5 // pred_check_branch
      %141 = sbr.rel (%p139) target = $region24
    $region23: #{tpu_custom_call.1} parent=5 // pred_region
      // Predicated region
      $region25: #{tpu_custom_call.1} parent=23 // pred_check
        %p142 = pneg %p43
      $region26: #{tpu_custom_call.1} parent=23 // pred_check_branch
        %144 = sbr.rel (%p142) target = $region28
      $region27: #{tpu_custom_call.1} parent=23 // pred_region
        %s145 = smul.u32 2, %s17
        %p146 = scmp.lt.s32.totalorder %s16, 1
        %s147 = scalar_select %p146, %s16, 1
        %p148 = scmp.lt.s32.totalorder %s145, 1
        %s149 = scalar_select %p148, %s145, 1
        %s150 = smul.addr %s147, 2
        %s151 = sadd.s32 %s149, %s150
        %s152 = smul.addr %s151, 4
        %s153 = scalar_lea.vmem %s0, %s152
        %s154 = smul.u32 2, %s17
      $region28: #{tpu_custom_call.1} parent=23 // pred_fallthru
        _
    $region24: #{tpu_custom_call.1} parent=5 // pred_fallthru
      _
    %p155 = scmp.le.s32.totalorder 1, %s9
    %p156 = scmp.lt.s32.totalorder %s9, 3
    %p157 = pnand %p155, %p156
    %p158 = pneg %p157
    // Predicated region
    $region29: #{tpu_custom_call.1} parent=5 // pred_check
      _
    $region30: #{tpu_custom_call.1} parent=5 // pred_check_branch
      %160 = sbr.rel (%p157) target = $region32
    $region31: #{tpu_custom_call.1} parent=5 // pred_region
      %s161 = ssub.s32 %s9, 1
      %s162 = smul.u32 2, %s19
      %p163 = scmp.lt.s32.totalorder %s18, 1
      %s164 = scalar_select %p163, %s18, 1
      %p165 = scmp.lt.s32.totalorder %s162, 1
      %s166 = scalar_select %p165, %s162, 1
      %s167 = smul.addr %s164, 2
      %s168 = sadd.s32 %s166, %s167
      %s169 = smul.addr %s168, 4
      %s170 = scalar_lea.vmem %s0, %s169
      %p171 = pneg %p49
      %p172 = pneg %p46
      %p173 = pneg %p70
      %p174 = pneg %p67
      %p175 = pneg %p91
      %p176 = pneg %p88
      %p177 = pneg %p117
      %p178 = pneg %p114
      %p179 = scmp.lt.s32.totalorder %s18, 1
      %s180 = scalar_select %p179, %s18, 1
      %s181 = smul.addr %s180, 4
      %s182 = smul.addr %s181, 8
      %s183 = scalar_lea.vmem %s3, %s182
      %s184 = smul.u32 2, %s19
      %p185 = scmp.lt.s32.totalorder %s18, 1
      %s186 = scalar_select %p185, %s18, 1
      %p187 = scmp.lt.s32.totalorder %s184, 1
      %s188 = scalar_select %p187, %s184, 1
      %s189 = smul.addr %s186, 2
      %s190 = sadd.s32 %s188, %s189
      %s191 = smul.addr %s190, 4
      %s192 = scalar_lea.vmem %s0, %s191
      %s193 = smul.u32 2, %s19
      %p194 = scmp.lt.s32.totalorder %s18, 1
      %s195 = scalar_select %p194, %s18, 1
      %s196 = smul.addr %s195, 4
      %s197 = smul.addr %s196, 8
      %s198 = scalar_lea.vmem %s3, %s197
      %p199 = scmp.eq.s32.totalorder %s19, 0
      // Predicated region
      $region33: #{tpu_custom_call.1} parent=31 // pred_check
        %p200 = pneg %p199
      $region34: #{tpu_custom_call.1} parent=31 // pred_check_branch
        %202 = sbr.rel (%p200) target = $region36
      $region35: #{tpu_custom_call.1} parent=31 // pred_region
        %203 = vst [vmem:[#allocation2] sm:$0xff] 0.0
        %204 = vst [vmem:[#allocation2 + $0x8] sm:$0xff] 0.0
        %205 = vst [vmem:[#allocation2 + $0x10] sm:$0xff] 0.0
        %206 = vst [vmem:[#allocation2 + $0x18] sm:$0xff] 0.0
      $region36: #{tpu_custom_call.1} parent=31 // pred_fallthru
        _
      %v207 = vld [vmem:[%s192] sm:$0xff]
      %v208 = vld [vmem:[%s1] sm:$0xff]
      %v209 = vld [vmem:[%s1 + $0x8] sm:$0xff]
      %v210 = vld [vmem:[%s1 + $0x10] sm:$0xff]
      %v211 = vld [vmem:[%s1 + $0x18] sm:$0xff]
      %v212 = vld [vmem:[%s2] sm:$0xff]
      %v213 = vld [vmem:[%s2 + $0x8] sm:$0xff]
      %v214 = vld [vmem:[%s2 + $0x10] sm:$0xff]
      %v215 = vld [vmem:[%s2 + $0x18] sm:$0xff]
      %217 = vset.pattern.permute.xlu0 0
      %218 = vperm.xlu0 %217, %v212
      %v219 = vpop.permute.xlu0 %218
      %222 = vset.pattern.permute.xlu0 0
      %223 = vperm.xlu0 %222, %v213
      %v224 = vpop.permute.xlu0 %223
      %227 = vset.pattern.permute.xlu0 0
      %228 = vperm.xlu0 %227, %v214
      %v229 = vpop.permute.xlu0 %228
      %232 = vset.pattern.permute.xlu0 0
      %233 = vperm.xlu0 %232, %v215
      %v234 = vpop.permute.xlu0 %233
      %v237 = vcombine.high %v207, %v207
      %vm238 = vcmask 31744
      %v240 = vsel %vm238, %v208, 0
      %v243 = vsel %vm238, %v209, 0
      %v246 = vsel %vm238, %v210, 0
      %v249 = vsel %vm238, %v211, 0
      %vm251 = vcmask 1043456
      %v252 = vsel %vm251, %v207, 0
      %v254 = vsel %vm251, %v237, 0
      %256 = vmatprep.subr.mxu0 0.0
      %257 = vmatpush1.msra.mxu0 0.0
      %258 = vmatprep.subr.mxu0 0.0
      %259 = vmatpush1.msra.mxu0 0.0
      %260 = vmatprep.subr.mxu0 0.0
      %261 = vmatpush1.msra.mxu0 0.0
      %262 = vmatprep.subr.mxu0 0.0
      %263 = vmatpush1.msra.mxu0 0.0
      %264 = vmatprep.subr.mxu0 0.0
      %265 = vmatpush1.msra.mxu0 0.0
      %266 = vmatprep.subr.mxu0 0.0
      %267 = vmatpush1.msra.mxu0 0.0
      %268 = vmatprep.subr.mxu0 0.0
      %269 = vmatpush1.msra.mxu0 0.0
      %270 = vmatprep.subr.mxu0 0.0
      %271 = vmatpush1.msra.mxu0 0.0
      %272 = vmatprep.subr.mxu0 0.0
      %273 = vmatpush1.msra.mxu0 0.0
      %274 = vmatprep.subr.mxu0 0.0
      %275 = vmatpush1.msra.mxu0 0.0
      %276 = vmatprep.subr.mxu0 0.0
      %277 = vmatpush1.msra.mxu0 0.0
      %278 = vmatprep.subr.mxu0 0.0
      %279 = vmatpush1.msra.mxu0 0.0
      %280 = vmatprep.subr.mxu0 0.0
      %281 = vmatpush1.msra.mxu0 0.0
      %282 = vmatprep.subr.mxu0 0.0
      %283 = vmatpush1.msra.mxu0 0.0
      %284 = vmatprep.subr.mxu0 0.0
      %285 = vmatpush1.msra.mxu0 0.0
      %286 = vmatprep.subr.mxu0 %v254
      %287 = vmatpush1.msra.mxu0 %v252
      %288 = vmatprep.subr.mxu0 0.0
      %289 = vmatpush2.msra.mxu0 0.0
      %290 = vmatprep.subr.mxu0 0.0
      %291 = vmatpush2.msra.mxu0 0.0
      %292 = vmatprep.subr.mxu0 0.0
      %293 = vmatpush2.msra.mxu0 0.0
      %294 = vmatprep.subr.mxu0 0.0
      %295 = vmatpush2.msra.mxu0 0.0
      %296 = vmatprep.subr.mxu0 0.0
      %297 = vmatpush2.msra.mxu0 0.0
      %298 = vmatprep.subr.mxu0 0.0
      %299 = vmatpush2.msra.mxu0 0.0
      %300 = vmatprep.subr.mxu0 0.0
      %301 = vmatpush2.msra.mxu0 0.0
      %302 = vmatprep.subr.mxu0 0.0
      %303 = vmatpush2.msra.mxu0 0.0
      %304 = vmatprep.subr.mxu0 0.0
      %305 = vmatpush2.msra.mxu0 0.0
      %306 = vmatprep.subr.mxu0 0.0
      %307 = vmatpush2.msra.mxu0 0.0
      %308 = vmatprep.subr.mxu0 0.0
      %309 = vmatpush2.msra.mxu0 0.0
      %310 = vmatprep.subr.mxu0 0.0
      %311 = vmatpush2.msra.mxu0 0.0
      %312 = vmatprep.subr.mxu0 0.0
      %313 = vmatpush2.msra.mxu0 0.0
      %314 = vmatprep.subr.mxu0 0.0
      %315 = vmatpush2.msra.mxu0 0.0
      %316 = vmatprep.subr.mxu0 0.0
      %317 = vmatpush2.msra.mxu0 0.0
      %318 = vmatprep.subr.mxu0 0.0
      %319 = vmatpush2.msra.mxu0 0.0
      %320 = vmatprep.mubr.f32.mxu0 0.0
      %321 = vmatmul.mubr.f32.gmra.mxu0 %v240
      %v322 = vpop.f32.mrf.mxu0
      %v323 = vadd.f32 %v219, %v322
      %v324 = vpop.f32.mrf.mxu0
      %v325 = vadd.f32 %v219, %v324
      %326 = vmatprep.mubr.f32.mxu0 0.0
      %327 = vmatmul.mubr.f32.gmra.mxu0 %v243
      %v328 = vpop.f32.mrf.mxu0
      %v329 = vadd.f32 %v224, %v328
      %v330 = vpop.f32.mrf.mxu0
      %v331 = vadd.f32 %v224, %v330
      %332 = vmatprep.mubr.f32.mxu0 0.0
      %333 = vmatmul.mubr.f32.gmra.mxu0 %v246
      %v334 = vpop.f32.mrf.mxu0
      %v335 = vadd.f32 %v229, %v334
      %v336 = vpop.f32.mrf.mxu0
      %v337 = vadd.f32 %v229, %v336
      %338 = vmatprep.mubr.f32.mxu0 0.0
      %339 = vmatmul.mubr.f32.gmra.mxu0 %v249
      %v340 = vpop.f32.mrf.mxu0
      %v341 = vadd.f32 %v234, %v340
      %v342 = vpop.f32.mrf.mxu0
      %v343 = vadd.f32 %v234, %v342
      %344 = vdwg.mxu0
      %v345 = vmax.f32 %v323, 0.0
      %v346 = vmax.f32 %v325, 0.0
      %v347 = vmax.f32 %v329, 0.0
      %v348 = vmax.f32 %v331, 0.0
      %v349 = vmax.f32 %v335, 0.0
      %v350 = vmax.f32 %v337, 0.0
      %v351 = vmax.f32 %v341, 0.0
      %v352 = vmax.f32 %v343, 0.0
      %v353 = vld [vmem:[#allocation2] sm:$0xff]
      %v354 = vld [vmem:[#allocation2 + $0x8] sm:$0xff]
      %v355 = vld [vmem:[#allocation2 + $0x10] sm:$0xff]
      %v356 = vld [vmem:[#allocation2 + $0x18] sm:$0xff]
      %v357 = vadd.f32 %v353, %v345
      %v358 = vadd.f32 %v354, %v347
      %v359 = vadd.f32 %v355, %v349
      %v360 = vadd.f32 %v356, %v351
      %361 = vst [vmem:[#allocation2] sm:$0xff] %v357
      %362 = vst [vmem:[#allocation2 + $0x8] sm:$0xff] %v358
      %363 = vst [vmem:[#allocation2 + $0x10] sm:$0xff] %v359
      %364 = vst [vmem:[#allocation2 + $0x18] sm:$0xff] %v360
      %v365 = vld [vmem:[#allocation2] sm:$0xff]
      %v366 = vld [vmem:[#allocation2 + $0x8] sm:$0xff]
      %v367 = vld [vmem:[#allocation2 + $0x10] sm:$0xff]
      %v368 = vld [vmem:[#allocation2 + $0x18] sm:$0xff]
      %v369 = vadd.f32 %v365, %v346
      %v370 = vadd.f32 %v366, %v348
      %v371 = vadd.f32 %v367, %v350
      %v372 = vadd.f32 %v368, %v352
      %373 = vst [vmem:[#allocation2] sm:$0xff] %v369
      %374 = vst [vmem:[#allocation2 + $0x8] sm:$0xff] %v370
      %375 = vst [vmem:[#allocation2 + $0x10] sm:$0xff] %v371
      %376 = vst [vmem:[#allocation2 + $0x18] sm:$0xff] %v372
      // Predicated region
      $region37: #{tpu_custom_call.1} parent=31 // pred_check
        %p377 = pneg %p199
      $region38: #{tpu_custom_call.1} parent=31 // pred_check_branch
        %379 = sbr.rel (%p377) target = $region40
      $region39: #{tpu_custom_call.1} parent=31 // pred_region
        %v380 = vld [vmem:[#allocation2] sm:$0xff]
        %v381 = vld [vmem:[#allocation2 + $0x8] sm:$0xff]
        %v382 = vld [vmem:[#allocation2 + $0x10] sm:$0xff]
        %v383 = vld [vmem:[#allocation2 + $0x18] sm:$0xff]
        %384 = vadd.xlane.f32.xlu0 %v380
        %v385 = vpop.xlane.xlu0 %384
        %386 = vadd.xlane.f32.xlu0 %v381
        %v387 = vpop.xlane.xlu0 %386
        %388 = vadd.xlane.f32.xlu0 %v382
        %v389 = vpop.xlane.xlu0 %388
        %390 = vadd.xlane.f32.xlu0 %v383
        %v391 = vpop.xlane.xlu0 %390
        %v392 = vmul.f32 %v385, 0.00390625
        %v393 = vmul.f32 %v387, 0.00390625
        %v394 = vmul.f32 %v389, 0.00390625
        %v395 = vmul.f32 %v391, 0.00390625
        %vm396 = vcmask 7168
        %397 = vst.msk [vmem:[%s198] sm:$0xff] %vm396, %v392
        %398 = vst.msk [vmem:[%s198 + $0x8] sm:$0xff] %vm396, %v393
        %399 = vst.msk [vmem:[%s198 + $0x10] sm:$0xff] %vm396, %v394
        %400 = vst.msk [vmem:[%s198 + $0x18] sm:$0xff] %vm396, %v395
      $region40: #{tpu_custom_call.1} parent=31 // pred_fallthru
        _
      %p401 = scmp.lt.s32.totalorder %s18, 1
      %s402 = scalar_select %p401, %s18, 1
      %s403 = smul.addr %s402, 4
      %s404 = smul.addr %s403, 8
      %s405 = scalar_lea.vmem %s3, %s404
      // Predicated region
      $region41: #{tpu_custom_call.1} parent=31 // pred_check
        %p406 = pneg %p114
      $region42: #{tpu_custom_call.1} parent=31 // pred_check_branch
        %408 = sbr.rel (%p406) target = $region44
      $region43: #{tpu_custom_call.1} parent=31 // pred_region
        _
      $region44: #{tpu_custom_call.1} parent=31 // pred_fallthru
        _
    $region32: #{tpu_custom_call.1} parent=5 // pred_fallthru
      _
    %p409 = scmp.le.s32.totalorder 2, %s9
    // Predicated region
    $region45: #{tpu_custom_call.1} parent=5 // pred_check
      %p410 = pneg %p409
    $region46: #{tpu_custom_call.1} parent=5 // pred_check_branch
      %412 = sbr.rel (%p410) target = $region48
    $region47: #{tpu_custom_call.1} parent=5 // pred_region
      %s413 = ssub.s32 %s9, 2
      // Predicated region
      $region49: #{tpu_custom_call.1} parent=47 // pred_check
        %p414 = pneg %p120
      $region50: #{tpu_custom_call.1} parent=47 // pred_check_branch
        %416 = sbr.rel (%p414) target = $region52
      $region51: #{tpu_custom_call.1} parent=47 // pred_region
        %p417 = scmp.lt.s32.totalorder %s20, 1
        %s418 = scalar_select %p417, %s20, 1
        %s419 = smul.addr %s418, 4
        %s420 = smul.addr %s419, 8
        %s421 = scalar_lea.vmem %s3, %s420
      $region52: #{tpu_custom_call.1} parent=47 // pred_fallthru
        _
    $region48: #{tpu_custom_call.1} parent=5 // pred_fallthru
      _
  $region6: #{tpu_custom_call.1} parent=0 // loop_footer
    %s13 = sadd.s32 1, %s9
  $region7: #{tpu_custom_call.1} parent=0 // loop_footer_branch
    %8 = sbr.rel target = $region3
  $region8: #{tpu_custom_call.1} parent=0 // loop_exit
    _

</llo_original>
